<compile_context>
chip_gen: v7x
topology: tpu7x:2x2x1
jax: 0.10.0
libtpu: 0.0.40
codegen_flags: <defaults>
</compile_context>

<pallas_src>
import jax
import jax.numpy as jnp
from jax.experimental import pallas as pl
from jax.experimental.pallas import tpu as pltpu

HIDDEN = 256      # fc1 output width
N_GENDER = 3      # fc2 output width
N_AGE = 4         # fc3 output width
HEAD_PAD = 128    # lane-dense padded fused-head width (gender | age | zeros)


def adversarial_kernel(x_ref, w1_ref, b1_ref, wh_ref, bh_ref, out_ref):
    # fc1: bf16 operands, f32 accumulation on the MXU; bias + relu in f32 on VPU.
    h = jnp.dot(x_ref[...], w1_ref[...], preferred_element_type=jnp.float32)
    h = jnp.maximum(h + b1_ref[...], 0.0)
    # Fused heads: one lane-dense (TILE_B, 128) matmul + bias.
    # Columns [0:3] = gender logits, [3:7] = age logits, rest = zero padding.
    out = jnp.dot(h.astype(jnp.bfloat16), wh_ref[...],
                  preferred_element_type=jnp.float32) + bh_ref[...]
    out_ref[...] = out.astype(out_ref.dtype)


def _round_up(n, m):
    return ((n + m - 1) // m) * m


def prepare_params(params):
    """One-time parameter prep (do this OUTSIDE the per-step call):
    transpose to (in, out), fuse + zero-pad the two heads to 128 lanes,
    and cast matmul operands to bf16 (accumulation stays f32 in the kernel)."""
    w1t = jnp.asarray(params["w1"]).T.astype(jnp.bfloat16)            # (D, 256)
    b1 = jnp.asarray(params["b1"]).reshape(1, HIDDEN).astype(jnp.float32)

    w_head = jnp.concatenate(
        [jnp.asarray(params["w2"]).T, jnp.asarray(params["w3"]).T], axis=1
    )                                                                  # (256, 7)
    w_head = jnp.pad(w_head, ((0, 0), (0, HEAD_PAD - w_head.shape[1])))
    b_head = jnp.concatenate(
        [jnp.asarray(params["b2"]), jnp.asarray(params["b3"])]
    )                                                                  # (7,)
    b_head = jnp.pad(b_head, (0, HEAD_PAD - b_head.shape[0]))

    return {
        "w1t": w1t,
        "b1": b1,
        "w_head": w_head.astype(jnp.bfloat16),                        # (256, 128)
        "b_head": b_head.reshape(1, HEAD_PAD).astype(jnp.float32),    # (1, 128)
    }


def adversarial_network(x, prep):
    """x: (B, feature_dim) float32. prep: output of prepare_params()."""
    B, D = x.shape
    # Batch tile: multiple of 8 sublanes, capped at 512 rows (x tile bf16 is
    # 512*D*2 bytes -> ~0.5 MiB at D=512; well under the VMEM budget with the
    # resident weights).
    tile_b = min(512, _round_up(B, 8))
    b_pad = _round_up(B, tile_b)

    x_bf16 = x.astype(jnp.bfloat16)
    if b_pad != B:
        x_bf16 = jnp.pad(x_bf16, ((0, b_pad - B), (0, 0)))

    grid = (b_pad // tile_b,)

    def const_spec(shape):
        # Weights / biases: same block every grid step -> VMEM-resident.
        return pl.BlockSpec(shape, lambda i: (0,) * len(shape))

    # TODO(synk): for very large feature_dim (>~16K on v7x's smaller VMEM) add a
    # K grid axis ("arbitrary") with an f32 accumulator scratch instead of
    # keeping W1 fully resident.
    fused = pl.pallas_call(
        adversarial_kernel,
        out_shape=jax.ShapeDtypeStruct((b_pad, HEAD_PAD), jnp.float32),
        grid=grid,
        in_specs=[
            pl.BlockSpec((tile_b, D), lambda i: (i, 0)),   # x: blocked on batch
            const_spec((D, HIDDEN)),                       # fc1 weight (bf16)
            const_spec((1, HIDDEN)),                       # fc1 bias (f32)
            const_spec((HIDDEN, HEAD_PAD)),                # fused head weight (bf16)
            const_spec((1, HEAD_PAD)),                     # fused head bias (f32)
        ],
        out_specs=pl.BlockSpec((tile_b, HEAD_PAD), lambda i: (i, 0)),
        compiler_params=pltpu.CompilerParams(
            # Batch axis is independent -> shard across both TCs on v7x.
            dimension_semantics=("parallel",),
        ),
    )(x_bf16, prep["w1t"], prep["b1"], prep["w_head"], prep["b_head"])

    gender_logits = fused[:B, :N_GENDER]
    age_logits = fused[:B, N_GENDER:N_GENDER + N_AGE]
    return gender_logits, age_logits


def init_params(key, feature_dim=512):
    """Deterministic synthetic init matching nn.Linear parameter shapes."""
    k1, k2, k3, k4, k5, k6 = jax.random.split(key, 6)

    def lin(kw, kb, out_f, in_f):
        bound = 1.0 / jnp.sqrt(in_f)
        w = jax.random.uniform(kw, (out_f, in_f), jnp.float32, -bound, bound)
        b = jax.random.uniform(kb, (out_f,), jnp.float32, -bound, bound)
        return w, b

    w1, b1 = lin(k1, k2, HIDDEN, feature_dim)
    w2, b2 = lin(k3, k4, N_GENDER, HIDDEN)
    w3, b3 = lin(k5, k6, N_AGE, HIDDEN)
    return {"w1": w1, "b1": b1, "w2": w2, "b2": b2, "w3": w3, "b3": b3}


if __name__ == "__main__":
    key = jax.random.PRNGKey(0)
    kx, kp = jax.random.split(key)

    feature_dim = 512   # module default
    batch = 8
    x = jax.random.normal(kx, (batch, feature_dim), jnp.float32)
    params = init_params(kp, feature_dim)

    prep = prepare_params(params)
    gender_logits, age_logits = adversarial_network(x, prep)
    jax.block_until_ready((gender_logits, age_logits))

    # Reference check in plain JAX (f32). Tolerance loosened because the kernel
    # uses bf16 matmul inputs with f32 accumulation.
    h_ref = jnp.maximum(x @ params["w1"].T + params["b1"], 0.0)
    g_ref = h_ref @ params["w2"].T + params["b2"]
    a_ref = h_ref @ params["w3"].T + params["b3"]
    assert gender_logits.shape == (batch, N_GENDER)
    assert age_logits.shape == (batch, N_AGE)
    assert jnp.allclose(gender_logits, g_ref, atol=5e-2, rtol=5e-2)
    assert jnp.allclose(age_logits, a_ref, atol=5e-2, rtol=5e-2)

    print("KERNEL_OK")
</pallas_src>

<mosaic_0001>
module attributes {stable_mosaic.version = 11 : i64} {
  func.func @adversarial_kernel(%arg0: i32, %arg1: memref<8x512xbf16, #tpu.memory_space<vmem>>, %arg2: memref<512x256xbf16, #tpu.memory_space<vmem>>, %arg3: memref<1x256xf32, #tpu.memory_space<vmem>>, %arg4: memref<256x128xbf16, #tpu.memory_space<vmem>>, %arg5: memref<1x128xf32, #tpu.memory_space<vmem>>, %arg6: memref<8x128xf32, #tpu.memory_space<vmem>>) attributes {dimension_semantics = [#tpu.dimension_semantics<parallel>], iteration_bounds = array<i64: 1>, scalar_prefetch = 0 : i64, scratch_operands = 0 : i64, tpu.core_type = #tpu.core_type<tc>, window_params = [{transform_indices = @transform_0, window_bounds = array<i64: 8, 512>}, {pipeline_mode = #tpu.pipeline_mode<synchronous>, transform_indices = @transform_1, window_bounds = array<i64: 512, 256>}, {pipeline_mode = #tpu.pipeline_mode<synchronous>, transform_indices = @transform_2, window_bounds = array<i64: 1, 256>}, {pipeline_mode = #tpu.pipeline_mode<synchronous>, transform_indices = @transform_3, window_bounds = array<i64: 256, 128>}, {pipeline_mode = #tpu.pipeline_mode<synchronous>, transform_indices = @transform_4, window_bounds = array<i64: 1, 128>}, {transform_indices = @transform_5, window_bounds = array<i64: 8, 128>}]} {
    %c0 = arith.constant 0 : index
    %c0_0 = arith.constant 0 : index
    %0 = vector.load %arg1[%c0, %c0_0] : memref<8x512xbf16, #tpu.memory_space<vmem>>, vector<8x512xbf16>
    %c0_1 = arith.constant 0 : index
    %c0_2 = arith.constant 0 : index
    %1 = vector.load %arg2[%c0_1, %c0_2] : memref<512x256xbf16, #tpu.memory_space<vmem>>, vector<512x256xbf16>
    %cst = arith.constant dense<0.000000e+00> : vector<8x256xf32>
    %2 = tpu.matmul %0, %1, %cst {dimension_numbers = #tpu.dot_dimension_numbers<[1], [0], [0], [1], [0, 0, 1, 1], [], []>} : vector<8x512xbf16>, vector<512x256xbf16>, vector<8x256xf32> -> vector<8x256xf32>
    %c0_3 = arith.constant 0 : index
    %c0_4 = arith.constant 0 : index
    %3 = vector.load %arg3[%c0_3, %c0_4] : memref<1x256xf32, #tpu.memory_space<vmem>>, vector<1x256xf32>
    %4 = vector.broadcast %3 : vector<1x256xf32> to vector<8x256xf32>
    %5 = arith.addf %2, %4 : vector<8x256xf32>
    %cst_5 = arith.constant 0.000000e+00 : f32
    %6 = vector.broadcast %cst_5 : f32 to vector<8x256xf32>
    %7 = arith.maximumf %5, %6 : vector<8x256xf32>
    %8 = arith.truncf %7 : vector<8x256xf32> to vector<8x256xbf16>
    %c0_6 = arith.constant 0 : index
    %c0_7 = arith.constant 0 : index
    %9 = vector.load %arg4[%c0_6, %c0_7] : memref<256x128xbf16, #tpu.memory_space<vmem>>, vector<256x128xbf16>
    %cst_8 = arith.constant dense<0.000000e+00> : vector<8x128xf32>
    %10 = tpu.matmul %8, %9, %cst_8 {dimension_numbers = #tpu.dot_dimension_numbers<[1], [0], [0], [1], [0, 0, 1, 1], [], []>} : vector<8x256xbf16>, vector<256x128xbf16>, vector<8x128xf32> -> vector<8x128xf32>
    %c0_9 = arith.constant 0 : index
    %c0_10 = arith.constant 0 : index
    %11 = vector.load %arg5[%c0_9, %c0_10] : memref<1x128xf32, #tpu.memory_space<vmem>>, vector<1x128xf32>
    %12 = vector.broadcast %11 : vector<1x128xf32> to vector<8x128xf32>
    %13 = arith.addf %10, %12 : vector<8x128xf32>
    %c0_11 = arith.constant 0 : index
    %c0_12 = arith.constant 0 : index
    %14 = vector.load %arg6[%c0_11, %c0_12] : memref<8x128xf32, #tpu.memory_space<vmem>>, vector<8x128xf32>
    tpu.vector_store %arg6[%c0_11, %c0_12], %13 {strides = array<i32>} : memref<8x128xf32, #tpu.memory_space<vmem>>, vector<8x128xf32>,
    return
  }
  func.func @transform_0(%arg0: i32) -> (i32, i32) {
    %c0_i32 = arith.constant 0 : i32
    %c0_i32_0 = arith.constant 0 : i32
    return %arg0, %c0_i32 : i32, i32
  }
  func.func @transform_1(%arg0: i32) -> (i32, i32) {
    %c0_i32 = arith.constant 0 : i32
    %c0_i32_0 = arith.constant 0 : i32
    %c0_i32_1 = arith.constant 0 : i32
    return %c0_i32, %c0_i32_0 : i32, i32
  }
  func.func @transform_2(%arg0: i32) -> (i32, i32) {
    %c0_i32 = arith.constant 0 : i32
    %c0_i32_0 = arith.constant 0 : i32
    %c0_i32_1 = arith.constant 0 : i32
    return %c0_i32, %c0_i32_0 : i32, i32
  }
  func.func @transform_3(%arg0: i32) -> (i32, i32) {
    %c0_i32 = arith.constant 0 : i32
    %c0_i32_0 = arith.constant 0 : i32
    %c0_i32_1 = arith.constant 0 : i32
    return %c0_i32, %c0_i32_0 : i32, i32
  }
  func.func @transform_4(%arg0: i32) -> (i32, i32) {
    %c0_i32 = arith.constant 0 : i32
    %c0_i32_0 = arith.constant 0 : i32
    %c0_i32_1 = arith.constant 0 : i32
    return %c0_i32, %c0_i32_0 : i32, i32
  }
  func.func @transform_5(%arg0: i32) -> (i32, i32) {
    %c0_i32 = arith.constant 0 : i32
    %c0_i32_0 = arith.constant 0 : i32
    return %arg0, %c0_i32 : i32, i32
  }
}

</mosaic_0001>

<llo_original>
// kernel: tpu_custom_call.1
$region0: #{tpu_custom_call.1}
  #allocation0 [shape = 'u32[]', space=smem, size = 0x4, offset = 0x4, fixed_abs, tag = 'smem constant byte address 0x4 - core index']
  #allocation1 [shape = 'u32[144,128]{1,0:T(1,128)}', space=vmem, size = 0x12000, scoped, tag = 'internal scratch']
  %s0 = inlined_call_operand.hbm [shape: bf16[8,512], index: 0, kind: input, shape index: {}]
  %s1 = inlined_call_operand.hbm [shape: bf16[512,256], index: 1, kind: input, shape index: {}]
  %s2 = inlined_call_operand.vmem [shape: f32[1,256], index: 2, kind: input, shape index: {}]
  %s3 = inlined_call_operand.hbm [shape: bf16[256,128], index: 3, kind: input, shape index: {}]
  %s4 = inlined_call_operand.vmem [shape: f32[1,128], index: 4, kind: input, shape index: {}]
  %s5 = inlined_call_operand.hbm [shape: f32[8,128], index: 5, kind: output, shape index: {}]
  %s6 = sld [smem:[#allocation0]]
  $region42: #{tpu_custom_call.1} parent=0
    _
  %s8 = ssub.s32 1, %s6
  %s9 = scalar_select 0, %s8, %s6
  $region1: #{tpu_custom_call.1} parent=0
    #allocation2 [shape = 'u8[8192]{0}', space=vmem, size = 0x2000, scoped, tag = 'input window, operand 0, single buffered']
    #allocation3 [shape = 's32[1]{0}', space=sflag, size = 0x4, scoped, tag = 'scoped memory for tpu_custom_call.1']
    #allocation4 [shape = 's32[1]{0}', space=sflag, size = 0x4, scoped, tag = 'scoped memory for tpu_custom_call.1']
    #allocation5 [shape = 'u8[262144]{0}', space=vmem, size = 0x40000, scoped, tag = 'input window, operand 1, single buffered']
    #allocation6 [shape = 's32[1]{0}', space=sflag, size = 0x4, scoped, tag = 'scoped memory for tpu_custom_call.1']
    #allocation7 [shape = 'u8[65536]{0}', space=vmem, size = 0x10000, scoped, tag = 'input window, operand 3, single buffered']
    #allocation8 [shape = 'u8[4096]{0}', space=vmem, size = 0x1000, scoped, tag = 'output window, operand 0, single buffered']
    %10 = vsyncpa [#allocation3], 0
    %11 = vsyncpa [#allocation6], 0
    %12 = vsyncpa [#allocation4], 0
    // Predicated region
    $region2: #{tpu_custom_call.1} parent=1 // pred_check
      _
    $region3: #{tpu_custom_call.1} parent=1 // pred_check_branch
      %14 = sbr.rel (0) target = $region5
    $region4: #{tpu_custom_call.1} parent=1 // pred_region
      %s16 = ssub.s32 256, 256
      %17 = vsyncadd [#allocation3], %s16
      %s19 = sshll.u32 [#allocation2], 4
      %s20 = int_to_ptr.vmem [resolvable:$true] %s19
      %22 = dma.hbm_to_vmem [thread:$0]  %s0, 256, %s20, [#allocation3]
    $region5: #{tpu_custom_call.1} parent=1 // pred_fallthru
      _
    // Predicated region
    $region6: #{tpu_custom_call.1} parent=1 // pred_check
      _
    $region7: #{tpu_custom_call.1} parent=1 // pred_check_branch
      %24 = sbr.rel (0) target = $region9
    $region8: #{tpu_custom_call.1} parent=1 // pred_region
      %s26 = ssub.s32 8192, 8192
      %27 = vsyncadd [#allocation6], %s26
      %s28 = sshll.u32 [#allocation5], 4
      %s29 = int_to_ptr.vmem [resolvable:$true] %s28
      %34 = dma.hbm_to_vmem [thread:$0]  %s1, 8192, %s29, [#allocation6], 128, 128, 8
    $region9: #{tpu_custom_call.1} parent=1 // pred_fallthru
      _
    // Predicated region
    $region10: #{tpu_custom_call.1} parent=1 // pred_check
      _
    $region11: #{tpu_custom_call.1} parent=1 // pred_check_branch
      %36 = sbr.rel (0) target = $region13
    $region12: #{tpu_custom_call.1} parent=1 // pred_region
      _
    $region13: #{tpu_custom_call.1} parent=1 // pred_fallthru
      _
    // Predicated region
    $region14: #{tpu_custom_call.1} parent=1 // pred_check
      _
    $region15: #{tpu_custom_call.1} parent=1 // pred_check_branch
      %38 = sbr.rel (0) target = $region17
    $region16: #{tpu_custom_call.1} parent=1 // pred_region
      %s40 = ssub.s32 2048, 2048
      %41 = vsyncadd [#allocation6], %s40
      %s42 = sshll.u32 [#allocation7], 4
      %s43 = int_to_ptr.vmem [resolvable:$true] %s42
      %48 = dma.hbm_to_vmem [thread:$0]  %s3, 2048, %s43, [#allocation6], 64, 64, 4
    $region17: #{tpu_custom_call.1} parent=1 // pred_fallthru
      _
    // Predicated region
    $region18: #{tpu_custom_call.1} parent=1 // pred_check
      _
    $region19: #{tpu_custom_call.1} parent=1 // pred_check_branch
      %50 = sbr.rel (0) target = $region21
    $region20: #{tpu_custom_call.1} parent=1 // pred_region
      _
    $region21: #{tpu_custom_call.1} parent=1 // pred_fallthru
      _
    // Predicated region
    $region22: #{tpu_custom_call.1} parent=1 // pred_check
      _
    $region23: #{tpu_custom_call.1} parent=1 // pred_check_branch
      %52 = sbr.rel (0) target = $region25
    $region24: #{tpu_custom_call.1} parent=1 // pred_region
      %53 = dma.done [#allocation3], 256
    $region25: #{tpu_custom_call.1} parent=1 // pred_fallthru
      _
    // Predicated region
    $region26: #{tpu_custom_call.1} parent=1 // pred_check
      _
    $region27: #{tpu_custom_call.1} parent=1 // pred_check_branch
      %55 = sbr.rel (0) target = $region29
    $region28: #{tpu_custom_call.1} parent=1 // pred_region
      %56 = dma.done [#allocation6], 8192
    $region29: #{tpu_custom_call.1} parent=1 // pred_fallthru
      _
    // Predicated region
    $region30: #{tpu_custom_call.1} parent=1 // pred_check
      _
    $region31: #{tpu_custom_call.1} parent=1 // pred_check_branch
      %58 = sbr.rel (0) target = $region33
    $region32: #{tpu_custom_call.1} parent=1 // pred_region
      %59 = dma.done [#allocation6], 2048
    $region33: #{tpu_custom_call.1} parent=1 // pred_fallthru
      _
    %v61 = vld [vmem:[#allocation2] sm:$0xff]
    %v62 = vld [vmem:[#allocation2 + $0x8] sm:$0xff]
    %v63 = vld [vmem:[#allocation5] sm:$0xff]
    %v64 = vld [vmem:[#allocation5 + $0x8] sm:$0xff]
    %v65 = vld [vmem:[#allocation5 + $0x10] sm:$0xff]
    %v66 = vld [vmem:[#allocation5 + $0x18] sm:$0xff]
    %v67 = vld [vmem:[#allocation5 + $0x20] sm:$0xff]
    %v68 = vld [vmem:[#allocation5 + $0x28] sm:$0xff]
    %v69 = vld [vmem:[#allocation5 + $0x30] sm:$0xff]
    %v70 = vld [vmem:[#allocation5 + $0x38] sm:$0xff]
    %v71 = vld [vmem:[#allocation5 + $0x40] sm:$0xff]
    %v72 = vld [vmem:[#allocation5 + $0x48] sm:$0xff]
    %v73 = vld [vmem:[#allocation5 + $0x50] sm:$0xff]
    %v74 = vld [vmem:[#allocation5 + $0x58] sm:$0xff]
    %v75 = vld [vmem:[#allocation5 + $0x60] sm:$0xff]
    %v76 = vld [vmem:[#allocation5 + $0x68] sm:$0xff]
    %v77 = vld [vmem:[#allocation5 + $0x70] sm:$0xff]
    %v78 = vld [vmem:[#allocation5 + $0x78] sm:$0xff]
    %v79 = vld [vmem:[#allocation5 + $0x80] sm:$0xff]
    %v80 = vld [vmem:[#allocation5 + $0x88] sm:$0xff]
    %v81 = vld [vmem:[#allocation5 + $0x90] sm:$0xff]
    %v82 = vld [vmem:[#allocation5 + $0x98] sm:$0xff]
    %v83 = vld [vmem:[#allocation5 + $0xa0] sm:$0xff]
    %v84 = vld [vmem:[#allocation5 + $0xa8] sm:$0xff]
    %v85 = vld [vmem:[#allocation5 + $0xb0] sm:$0xff]
    %v86 = vld [vmem:[#allocation5 + $0xb8] sm:$0xff]
    %v87 = vld [vmem:[#allocation5 + $0xc0] sm:$0xff]
    %v88 = vld [vmem:[#allocation5 + $0xc8] sm:$0xff]
    %v89 = vld [vmem:[#allocation5 + $0xd0] sm:$0xff]
    %v90 = vld [vmem:[#allocation5 + $0xd8] sm:$0xff]
    %v91 = vld [vmem:[#allocation5 + $0xe0] sm:$0xff]
    %v92 = vld [vmem:[#allocation5 + $0xe8] sm:$0xff]
    %v93 = vld [vmem:[#allocation5 + $0xf0] sm:$0xff]
    %v94 = vld [vmem:[#allocation5 + $0xf8] sm:$0xff]
    %v95 = vld [vmem:[#allocation5 + $0x100] sm:$0xff]
    %v96 = vld [vmem:[#allocation5 + $0x108] sm:$0xff]
    %v97 = vld [vmem:[#allocation5 + $0x110] sm:$0xff]
    %v98 = vld [vmem:[#allocation5 + $0x118] sm:$0xff]
    %v99 = vld [vmem:[#allocation5 + $0x120] sm:$0xff]
    %v100 = vld [vmem:[#allocation5 + $0x128] sm:$0xff]
    %v101 = vld [vmem:[#allocation5 + $0x130] sm:$0xff]
    %v102 = vld [vmem:[#allocation5 + $0x138] sm:$0xff]
    %v103 = vld [vmem:[#allocation5 + $0x140] sm:$0xff]
    %v104 = vld [vmem:[#allocation5 + $0x148] sm:$0xff]
    %v105 = vld [vmem:[#allocation5 + $0x150] sm:$0xff]
    %v106 = vld [vmem:[#allocation5 + $0x158] sm:$0xff]
    %v107 = vld [vmem:[#allocation5 + $0x160] sm:$0xff]
    %v108 = vld [vmem:[#allocation5 + $0x168] sm:$0xff]
    %v109 = vld [vmem:[#allocation5 + $0x170] sm:$0xff]
    %v110 = vld [vmem:[#allocation5 + $0x178] sm:$0xff]
    %v111 = vld [vmem:[#allocation5 + $0x180] sm:$0xff]
    %v112 = vld [vmem:[#allocation5 + $0x188] sm:$0xff]
    %v113 = vld [vmem:[#allocation5 + $0x190] sm:$0xff]
    %v114 = vld [vmem:[#allocation5 + $0x198] sm:$0xff]
    %v115 = vld [vmem:[#allocation5 + $0x1a0] sm:$0xff]
    %v116 = vld [vmem:[#allocation5 + $0x1a8] sm:$0xff]
    %v117 = vld [vmem:[#allocation5 + $0x1b0] sm:$0xff]
    %v118 = vld [vmem:[#allocation5 + $0x1b8] sm:$0xff]
    %v119 = vld [vmem:[#allocation5 + $0x1c0] sm:$0xff]
    %v120 = vld [vmem:[#allocation5 + $0x1c8] sm:$0xff]
    %v121 = vld [vmem:[#allocation5 + $0x1d0] sm:$0xff]
    %v122 = vld [vmem:[#allocation5 + $0x1d8] sm:$0xff]
    %v123 = vld [vmem:[#allocation5 + $0x1e0] sm:$0xff]
    %v124 = vld [vmem:[#allocation5 + $0x1e8] sm:$0xff]
    %v125 = vld [vmem:[#allocation5 + $0x1f0] sm:$0xff]
    %v126 = vld [vmem:[#allocation5 + $0x1f8] sm:$0xff]
    %v127 = vld [vmem:[%s2] sm:$0x3]
    %v129 = vlaneseq
    %v130 = vshrl.u32 %v129, 7
    %v131 = vsub.s32 0, %v130
    %v132 = vrot.slane %v127, %v131
    %v133 = vlaneseq
    %v134 = vshrl.u32 %v133, 7
    %v135 = vsub.s32 1, %v134
    %v136 = vrot.slane %v127, %v135
    %v141 = vunpack.c.l.b16 %v61
    %v142 = vunpack.c.h.b16 %v61
    %v143 = vunpack.c.l.b16 %v62
    %v144 = vunpack.c.h.b16 %v62
    %v145 = vpack.c.b16 %v141, %v141
    %v146 = vpack.c.b16 %v142, %v142
    %v147 = vpack.c.b16 %v143, %v143
    %v148 = vpack.c.b16 %v144, %v144
    %v217 = vunpack.c.l.b16 %v63
    %v218 = vunpack.c.h.b16 %v63
    %v219 = vunpack.c.l.b16 %v64
    %v220 = vunpack.c.h.b16 %v64
    %v221 = vunpack.c.l.b16 %v65
    %v222 = vunpack.c.h.b16 %v65
    %v223 = vunpack.c.l.b16 %v66
    %v224 = vunpack.c.h.b16 %v66
    %v225 = vunpack.c.l.b16 %v67
    %v226 = vunpack.c.h.b16 %v67
    %v227 = vunpack.c.l.b16 %v68
    %v228 = vunpack.c.h.b16 %v68
    %v229 = vunpack.c.l.b16 %v69
    %v230 = vunpack.c.h.b16 %v69
    %v231 = vunpack.c.l.b16 %v70
    %v232 = vunpack.c.h.b16 %v70
    %v233 = vunpack.c.l.b16 %v71
    %v234 = vunpack.c.h.b16 %v71
    %v235 = vunpack.c.l.b16 %v72
    %v236 = vunpack.c.h.b16 %v72
    %v237 = vunpack.c.l.b16 %v73
    %v238 = vunpack.c.h.b16 %v73
    %v239 = vunpack.c.l.b16 %v74
    %v240 = vunpack.c.h.b16 %v74
    %v241 = vunpack.c.l.b16 %v75
    %v242 = vunpack.c.h.b16 %v75
    %v243 = vunpack.c.l.b16 %v76
    %v244 = vunpack.c.h.b16 %v76
    %v245 = vunpack.c.l.b16 %v77
    %v246 = vunpack.c.h.b16 %v77
    %v247 = vunpack.c.l.b16 %v78
    %v248 = vunpack.c.h.b16 %v78
    %v249 = vunpack.c.l.b16 %v79
    %v250 = vunpack.c.h.b16 %v79
    %v251 = vunpack.c.l.b16 %v80
    %v252 = vunpack.c.h.b16 %v80
    %v253 = vunpack.c.l.b16 %v81
    %v254 = vunpack.c.h.b16 %v81
    %v255 = vunpack.c.l.b16 %v82
    %v256 = vunpack.c.h.b16 %v82
    %v257 = vunpack.c.l.b16 %v83
    %v258 = vunpack.c.h.b16 %v83
    %v259 = vunpack.c.l.b16 %v84
    %v260 = vunpack.c.h.b16 %v84
    %v261 = vunpack.c.l.b16 %v85
    %v262 = vunpack.c.h.b16 %v85
    %v263 = vunpack.c.l.b16 %v86
    %v264 = vunpack.c.h.b16 %v86
    %v265 = vunpack.c.l.b16 %v87
    %v266 = vunpack.c.h.b16 %v87
    %v267 = vunpack.c.l.b16 %v88
    %v268 = vunpack.c.h.b16 %v88
    %v269 = vunpack.c.l.b16 %v89
    %v270 = vunpack.c.h.b16 %v89
    %v271 = vunpack.c.l.b16 %v90
    %v272 = vunpack.c.h.b16 %v90
    %v273 = vunpack.c.l.b16 %v91
    %v274 = vunpack.c.h.b16 %v91
    %v275 = vunpack.c.l.b16 %v92
    %v276 = vunpack.c.h.b16 %v92
    %v277 = vunpack.c.l.b16 %v93
    %v278 = vunpack.c.h.b16 %v93
    %v279 = vunpack.c.l.b16 %v94
    %v280 = vunpack.c.h.b16 %v94
    %v281 = vunpack.c.l.b16 %v95
    %v282 = vunpack.c.h.b16 %v95
    %v283 = vunpack.c.l.b16 %v96
    %v284 = vunpack.c.h.b16 %v96
    %v285 = vunpack.c.l.b16 %v97
    %v286 = vunpack.c.h.b16 %v97
    %v287 = vunpack.c.l.b16 %v98
    %v288 = vunpack.c.h.b16 %v98
    %v289 = vunpack.c.l.b16 %v99
    %v290 = vunpack.c.h.b16 %v99
    %v291 = vunpack.c.l.b16 %v100
    %v292 = vunpack.c.h.b16 %v100
    %v293 = vunpack.c.l.b16 %v101
    %v294 = vunpack.c.h.b16 %v101
    %v295 = vunpack.c.l.b16 %v102
    %v296 = vunpack.c.h.b16 %v102
    %v297 = vunpack.c.l.b16 %v103
    %v298 = vunpack.c.h.b16 %v103
    %v299 = vunpack.c.l.b16 %v104
    %v300 = vunpack.c.h.b16 %v104
    %v301 = vunpack.c.l.b16 %v105
    %v302 = vunpack.c.h.b16 %v105
    %v303 = vunpack.c.l.b16 %v106
    %v304 = vunpack.c.h.b16 %v106
    %v305 = vunpack.c.l.b16 %v107
    %v306 = vunpack.c.h.b16 %v107
    %v307 = vunpack.c.l.b16 %v108
    %v308 = vunpack.c.h.b16 %v108
    %v309 = vunpack.c.l.b16 %v109
    %v310 = vunpack.c.h.b16 %v109
    %v311 = vunpack.c.l.b16 %v110
    %v312 = vunpack.c.h.b16 %v110
    %v313 = vunpack.c.l.b16 %v111
    %v314 = vunpack.c.h.b16 %v111
    %v315 = vunpack.c.l.b16 %v112
    %v316 = vunpack.c.h.b16 %v112
    %v317 = vunpack.c.l.b16 %v113
    %v318 = vunpack.c.h.b16 %v113
    %v319 = vunpack.c.l.b16 %v114
    %v320 = vunpack.c.h.b16 %v114
    %v321 = vunpack.c.l.b16 %v115
    %v322 = vunpack.c.h.b16 %v115
    %v323 = vunpack.c.l.b16 %v116
    %v324 = vunpack.c.h.b16 %v116
    %v325 = vunpack.c.l.b16 %v117
    %v326 = vunpack.c.h.b16 %v117
    %v327 = vunpack.c.l.b16 %v118
    %v328 = vunpack.c.h.b16 %v118
    %v329 = vunpack.c.l.b16 %v119
    %v330 = vunpack.c.h.b16 %v119
    %v331 = vunpack.c.l.b16 %v120
    %v332 = vunpack.c.h.b16 %v120
    %v333 = vunpack.c.l.b16 %v121
    %v334 = vunpack.c.h.b16 %v121
    %v335 = vunpack.c.l.b16 %v122
    %v336 = vunpack.c.h.b16 %v122
    %v337 = vunpack.c.l.b16 %v123
    %v338 = vunpack.c.h.b16 %v123
    %v339 = vunpack.c.l.b16 %v124
    %v340 = vunpack.c.h.b16 %v124
    %v341 = vunpack.c.l.b16 %v125
    %v342 = vunpack.c.h.b16 %v125
    %v343 = vunpack.c.l.b16 %v126
    %v344 = vunpack.c.h.b16 %v126
    %v345 = vpack.c.b16 %v219, %v217
    %v346 = vpack.c.b16 %v220, %v218
    %v347 = vpack.c.b16 %v223, %v221
    %v348 = vpack.c.b16 %v224, %v222
    %v349 = vpack.c.b16 %v227, %v225
    %v350 = vpack.c.b16 %v228, %v226
    %v351 = vpack.c.b16 %v231, %v229
    %v352 = vpack.c.b16 %v232, %v230
    %v353 = vpack.c.b16 %v235, %v233
    %v354 = vpack.c.b16 %v236, %v234
    %v355 = vpack.c.b16 %v239, %v237
    %v356 = vpack.c.b16 %v240, %v238
    %v357 = vpack.c.b16 %v243, %v241
    %v358 = vpack.c.b16 %v244, %v242
    %v359 = vpack.c.b16 %v247, %v245
    %v360 = vpack.c.b16 %v248, %v246
    %v361 = vpack.c.b16 %v251, %v249
    %v362 = vpack.c.b16 %v252, %v250
    %v363 = vpack.c.b16 %v255, %v253
    %v364 = vpack.c.b16 %v256, %v254
    %v365 = vpack.c.b16 %v259, %v257
    %v366 = vpack.c.b16 %v260, %v258
    %v367 = vpack.c.b16 %v263, %v261
    %v368 = vpack.c.b16 %v264, %v262
    %v369 = vpack.c.b16 %v267, %v265
    %v370 = vpack.c.b16 %v268, %v266
    %v371 = vpack.c.b16 %v271, %v269
    %v372 = vpack.c.b16 %v272, %v270
    %v373 = vpack.c.b16 %v275, %v273
    %v374 = vpack.c.b16 %v276, %v274
    %v375 = vpack.c.b16 %v279, %v277
    %v376 = vpack.c.b16 %v280, %v278
    %v377 = vpack.c.b16 %v283, %v281
    %v378 = vpack.c.b16 %v284, %v282
    %v379 = vpack.c.b16 %v287, %v285
    %v380 = vpack.c.b16 %v288, %v286
    %v381 = vpack.c.b16 %v291, %v289
    %v382 = vpack.c.b16 %v292, %v290
    %v383 = vpack.c.b16 %v295, %v293
    %v384 = vpack.c.b16 %v296, %v294
    %v385 = vpack.c.b16 %v299, %v297
    %v386 = vpack.c.b16 %v300, %v298
    %v387 = vpack.c.b16 %v303, %v301
    %v388 = vpack.c.b16 %v304, %v302
    %v389 = vpack.c.b16 %v307, %v305
    %v390 = vpack.c.b16 %v308, %v306
    %v391 = vpack.c.b16 %v311, %v309
    %v392 = vpack.c.b16 %v312, %v310
    %v393 = vpack.c.b16 %v315, %v313
    %v394 = vpack.c.b16 %v316, %v314
    %v395 = vpack.c.b16 %v319, %v317
    %v396 = vpack.c.b16 %v320, %v318
    %v397 = vpack.c.b16 %v323, %v321
    %v398 = vpack.c.b16 %v324, %v322
    %v399 = vpack.c.b16 %v327, %v325
    %v400 = vpack.c.b16 %v328, %v326
    %v401 = vpack.c.b16 %v331, %v329
    %v402 = vpack.c.b16 %v332, %v330
    %v403 = vpack.c.b16 %v335, %v333
    %v404 = vpack.c.b16 %v336, %v334
    %v405 = vpack.c.b16 %v339, %v337
    %v406 = vpack.c.b16 %v340, %v338
    %v407 = vpack.c.b16 %v343, %v341
    %v408 = vpack.c.b16 %v344, %v342
    %473 = vmatprep.subr.bf16.mxu0 %v346
    %474 = vmatpush1.bf16.msra.mxu0 %v345
    %475 = vmatprep.subr.bf16.mxu0 %v348
    %476 = vmatpush1.bf16.msra.mxu0 %v347
    %477 = vmatprep.subr.bf16.mxu0 %v350
    %478 = vmatpush1.bf16.msra.mxu0 %v349
    %479 = vmatprep.subr.bf16.mxu0 %v352
    %480 = vmatpush1.bf16.msra.mxu0 %v351
    %481 = vmatprep.subr.bf16.mxu0 %v354
    %482 = vmatpush1.bf16.msra.mxu0 %v353
    %483 = vmatprep.subr.bf16.mxu0 %v356
    %484 = vmatpush1.bf16.msra.mxu0 %v355
    %485 = vmatprep.subr.bf16.mxu0 %v358
    %486 = vmatpush1.bf16.msra.mxu0 %v357
    %487 = vmatprep.subr.bf16.mxu0 %v360
    %488 = vmatpush1.bf16.msra.mxu0 %v359
    %489 = vmatprep.subr.bf16.mxu0 %v362
    %490 = vmatpush1.bf16.msra.mxu0 %v361
    %491 = vmatprep.subr.bf16.mxu0 %v364
    %492 = vmatpush1.bf16.msra.mxu0 %v363
    %493 = vmatprep.subr.bf16.mxu0 %v366
    %494 = vmatpush1.bf16.msra.mxu0 %v365
    %495 = vmatprep.subr.bf16.mxu0 %v368
    %496 = vmatpush1.bf16.msra.mxu0 %v367
    %497 = vmatprep.subr.bf16.mxu0 %v370
    %498 = vmatpush1.bf16.msra.mxu0 %v369
    %499 = vmatprep.subr.bf16.mxu0 %v372
    %500 = vmatpush1.bf16.msra.mxu0 %v371
    %501 = vmatprep.subr.bf16.mxu0 %v374
    %502 = vmatpush1.bf16.msra.mxu0 %v373
    %503 = vmatprep.subr.bf16.mxu0 %v376
    %504 = vmatpush1.bf16.msra.mxu0 %v375
    %505 = vmatprep.mubr.bf16.mxu0 %v146
    %506 = vmatmul.mubr.bf16.gmra.mrb[0].mxu0 %v145
    %v507 = vpop.f32.mrb[0].mxu0
    %v508 = vadd.f32 %v132, %v507
    %v509 = vpop.f32.mrb[0].mxu0
    %v510 = vadd.f32 %v136, %v509
    %v511 = vpop.f32.mrb[0].mxu0
    %v512 = vpop.f32.mrb[0].mxu0
    %513 = vdwg.mxu0
    %514 = vmatprep.subr.bf16.mxu0 %v378
    %515 = vmatpush1.bf16.msra.mxu0 %v377
    %516 = vmatprep.subr.bf16.mxu0 %v380
    %517 = vmatpush1.bf16.msra.mxu0 %v379
    %518 = vmatprep.subr.bf16.mxu0 %v382
    %519 = vmatpush1.bf16.msra.mxu0 %v381
    %520 = vmatprep.subr.bf16.mxu0 %v384
    %521 = vmatpush1.bf16.msra.mxu0 %v383
    %522 = vmatprep.subr.bf16.mxu0 %v386
    %523 = vmatpush1.bf16.msra.mxu0 %v385
    %524 = vmatprep.subr.bf16.mxu0 %v388
    %525 = vmatpush1.bf16.msra.mxu0 %v387
    %526 = vmatprep.subr.bf16.mxu0 %v390
    %527 = vmatpush1.bf16.msra.mxu0 %v389
    %528 = vmatprep.subr.bf16.mxu0 %v392
    %529 = vmatpush1.bf16.msra.mxu0 %v391
    %530 = vmatprep.subr.bf16.mxu0 %v394
    %531 = vmatpush1.bf16.msra.mxu0 %v393
    %532 = vmatprep.subr.bf16.mxu0 %v396
    %533 = vmatpush1.bf16.msra.mxu0 %v395
    %534 = vmatprep.subr.bf16.mxu0 %v398
    %535 = vmatpush1.bf16.msra.mxu0 %v397
    %536 = vmatprep.subr.bf16.mxu0 %v400
    %537 = vmatpush1.bf16.msra.mxu0 %v399
    %538 = vmatprep.subr.bf16.mxu0 %v402
    %539 = vmatpush1.bf16.msra.mxu0 %v401
    %540 = vmatprep.subr.bf16.mxu0 %v404
    %541 = vmatpush1.bf16.msra.mxu0 %v403
    %542 = vmatprep.subr.bf16.mxu0 %v406
    %543 = vmatpush1.bf16.msra.mxu0 %v405
    %544 = vmatprep.subr.bf16.mxu0 %v408
    %545 = vmatpush1.bf16.msra.mxu0 %v407
    %546 = vmatprep.mubr.bf16.mxu0 %v148
    %547 = vmatmul.mubr.bf16.gmra.mrb[0].mxu0 %v147
    %v548 = vpop.f32.mrb[0].mxu0
    %v549 = vadd.f32 %v508, %v548
    %v550 = vpop.f32.mrb[0].mxu0
    %v551 = vadd.f32 %v510, %v550
    %v552 = vpop.f32.mrb[0].mxu0
    %v553 = vpop.f32.mrb[0].mxu0
    %554 = vdwg.mxu0
    %v555 = vmax.f32 %v549, 0.0
    %v556 = vmax.f32 %v551, 0.0
    %v557 = vpack.c.bf16 %v555, %v555
    %v558 = vpack.c.bf16 %v556, %v556
    %v559 = vld [vmem:[#allocation7] sm:$0xf]
    %v560 = vld [vmem:[#allocation7 + $0x4] sm:$0xf]
    %v561 = vld [vmem:[#allocation7 + $0x8] sm:$0xf]
    %v562 = vld [vmem:[#allocation7 + $0xc] sm:$0xf]
    %v563 = vld [vmem:[#allocation7 + $0x10] sm:$0xf]
    %v564 = vld [vmem:[#allocation7 + $0x14] sm:$0xf]
    %v565 = vld [vmem:[#allocation7 + $0x18] sm:$0xf]
    %v566 = vld [vmem:[#allocation7 + $0x1c] sm:$0xf]
    %v567 = vld [vmem:[#allocation7 + $0x20] sm:$0xf]
    %v568 = vld [vmem:[#allocation7 + $0x24] sm:$0xf]
    %v569 = vld [vmem:[#allocation7 + $0x28] sm:$0xf]
    %v570 = vld [vmem:[#allocation7 + $0x2c] sm:$0xf]
    %v571 = vld [vmem:[#allocation7 + $0x30] sm:$0xf]
    %v572 = vld [vmem:[#allocation7 + $0x34] sm:$0xf]
    %v573 = vld [vmem:[#allocation7 + $0x38] sm:$0xf]
    %v574 = vld [vmem:[#allocation7 + $0x3c] sm:$0xf]
    %v575 = vld [vmem:[#allocation7 + $0x40] sm:$0xf]
    %v576 = vld [vmem:[#allocation7 + $0x44] sm:$0xf]
    %v577 = vld [vmem:[#allocation7 + $0x48] sm:$0xf]
    %v578 = vld [vmem:[#allocation7 + $0x4c] sm:$0xf]
    %v579 = vld [vmem:[#allocation7 + $0x50] sm:$0xf]
    %v580 = vld [vmem:[#allocation7 + $0x54] sm:$0xf]
    %v581 = vld [vmem:[#allocation7 + $0x58] sm:$0xf]
    %v582 = vld [vmem:[#allocation7 + $0x5c] sm:$0xf]
    %v583 = vld [vmem:[#allocation7 + $0x60] sm:$0xf]
    %v584 = vld [vmem:[#allocation7 + $0x64] sm:$0xf]
    %v585 = vld [vmem:[#allocation7 + $0x68] sm:$0xf]
    %v586 = vld [vmem:[#allocation7 + $0x6c] sm:$0xf]
    %v587 = vld [vmem:[#allocation7 + $0x70] sm:$0xf]
    %v588 = vld [vmem:[#allocation7 + $0x74] sm:$0xf]
    %v589 = vld [vmem:[#allocation7 + $0x78] sm:$0xf]
    %v590 = vld [vmem:[#allocation7 + $0x7c] sm:$0xf]
    %v591 = vld [vmem:[%s4] sm:$0x1]
    %v593 = vlaneseq
    %v594 = vshrl.u32 %v593, 7
    %v595 = vsub.s32 0, %v594
    %v596 = vrot.slane %v591, %v595
    %v630 = vunpack.c.l.b16 %v559
    %v631 = vunpack.c.l.b16 %v560
    %v632 = vunpack.c.l.b16 %v561
    %v633 = vunpack.c.l.b16 %v562
    %v634 = vunpack.c.l.b16 %v563
    %v635 = vunpack.c.l.b16 %v564
    %v636 = vunpack.c.l.b16 %v565
    %v637 = vunpack.c.l.b16 %v566
    %v638 = vunpack.c.l.b16 %v567
    %v639 = vunpack.c.l.b16 %v568
    %v640 = vunpack.c.l.b16 %v569
    %v641 = vunpack.c.l.b16 %v570
    %v642 = vunpack.c.l.b16 %v571
    %v643 = vunpack.c.l.b16 %v572
    %v644 = vunpack.c.l.b16 %v573
    %v645 = vunpack.c.l.b16 %v574
    %v646 = vunpack.c.l.b16 %v575
    %v647 = vunpack.c.l.b16 %v576
    %v648 = vunpack.c.l.b16 %v577
    %v649 = vunpack.c.l.b16 %v578
    %v650 = vunpack.c.l.b16 %v579
    %v651 = vunpack.c.l.b16 %v580
    %v652 = vunpack.c.l.b16 %v581
    %v653 = vunpack.c.l.b16 %v582
    %v654 = vunpack.c.l.b16 %v583
    %v655 = vunpack.c.l.b16 %v584
    %v656 = vunpack.c.l.b16 %v585
    %v657 = vunpack.c.l.b16 %v586
    %v658 = vunpack.c.l.b16 %v587
    %v659 = vunpack.c.l.b16 %v588
    %v660 = vunpack.c.l.b16 %v589
    %v661 = vunpack.c.l.b16 %v590
    %v662 = vpack.c.b16 %v631, %v630
    %v663 = vpack.c.b16 %v633, %v632
    %v664 = vpack.c.b16 %v635, %v634
    %v665 = vpack.c.b16 %v637, %v636
    %v666 = vpack.c.b16 %v639, %v638
    %v667 = vpack.c.b16 %v641, %v640
    %v668 = vpack.c.b16 %v643, %v642
    %v669 = vpack.c.b16 %v645, %v644
    %v670 = vpack.c.b16 %v647, %v646
    %v671 = vpack.c.b16 %v649, %v648
    %v672 = vpack.c.b16 %v651, %v650
    %v673 = vpack.c.b16 %v653, %v652
    %v674 = vpack.c.b16 %v655, %v654
    %v675 = vpack.c.b16 %v657, %v656
    %v676 = vpack.c.b16 %v659, %v658
    %v677 = vpack.c.b16 %v661, %v660
    %694 = vmatprep.subr.bf16.mxu0 0
    %695 = vmatpush1.bf16.msra.mxu0 %v662
    %696 = vmatprep.subr.bf16.mxu0 0
    %697 = vmatpush1.bf16.msra.mxu0 %v663
    %698 = vmatprep.subr.bf16.mxu0 0
    %699 = vmatpush1.bf16.msra.mxu0 %v664
    %700 = vmatprep.subr.bf16.mxu0 0
    %701 = vmatpush1.bf16.msra.mxu0 %v665
    %702 = vmatprep.subr.bf16.mxu0 0
    %703 = vmatpush1.bf16.msra.mxu0 %v666
    %704 = vmatprep.subr.bf16.mxu0 0
    %705 = vmatpush1.bf16.msra.mxu0 %v667
    %706 = vmatprep.subr.bf16.mxu0 0
    %707 = vmatpush1.bf16.msra.mxu0 %v668
    %708 = vmatprep.subr.bf16.mxu0 0
    %709 = vmatpush1.bf16.msra.mxu0 %v669
    %710 = vmatprep.subr.bf16.mxu0 0
    %711 = vmatpush1.bf16.msra.mxu0 %v670
    %712 = vmatprep.subr.bf16.mxu0 0
    %713 = vmatpush1.bf16.msra.mxu0 %v671
    %714 = vmatprep.subr.bf16.mxu0 0
    %715 = vmatpush1.bf16.msra.mxu0 %v672
    %716 = vmatprep.subr.bf16.mxu0 0
    %717 = vmatpush1.bf16.msra.mxu0 %v673
    %718 = vmatprep.subr.bf16.mxu0 0
    %719 = vmatpush1.bf16.msra.mxu0 %v674
    %720 = vmatprep.subr.bf16.mxu0 0
    %721 = vmatpush1.bf16.msra.mxu0 %v675
    %722 = vmatprep.subr.bf16.mxu0 0
    %723 = vmatpush1.bf16.msra.mxu0 %v676
    %724 = vmatprep.subr.bf16.mxu0 0
    %725 = vmatpush1.bf16.msra.mxu0 %v677
    %726 = vmatprep.mubr.bf16.mxu0 %v558
    %727 = vmatmul.mubr.bf16.gmra.mrb[0].mxu0 %v557
    %v728 = vpop.f32.mrb[0].mxu0
    %v729 = vadd.f32 %v596, %v728
    %v730 = vpop.f32.mrb[0].mxu0
    %v731 = vpop.f32.mrb[0].mxu0
    %v732 = vpop.f32.mrb[0].mxu0
    %733 = vdwg.mxu0
    %734 = vst [vmem:[#allocation8] sm:$0xff] %v729
    // Predicated region
    $region34: #{tpu_custom_call.1} parent=1 // pred_check
      _
    $region35: #{tpu_custom_call.1} parent=1 // pred_check_branch
      %736 = sbr.rel (0) target = $region37
    $region36: #{tpu_custom_call.1} parent=1 // pred_region
      %s738 = ssub.s32 128, 128
      %739 = vsyncadd [#allocation4], %s738
      %s741 = sshll.u32 [#allocation8], 4
      %s742 = int_to_ptr.vmem [resolvable:$true] %s741
      %744 = dma.vmem_to_hbm [thread:$0]  %s742, 128, %s5, [#allocation4]
    $region37: #{tpu_custom_call.1} parent=1 // pred_fallthru
      _
    // Predicated region
    $region38: #{tpu_custom_call.1} parent=1 // pred_check
      _
    $region39: #{tpu_custom_call.1} parent=1 // pred_check_branch
      %746 = sbr.rel (0) target = $region41
    $region40: #{tpu_custom_call.1} parent=1 // pred_region
      %747 = dma.done [#allocation4], 128
    $region41: #{tpu_custom_call.1} parent=1 // pred_fallthru
      _
    %748 = vsyncpa [#allocation3], 1
    %749 = vsyncpa [#allocation6], 1
    %750 = vsyncpa [#allocation4], 1

</llo_original>
